<compile_context>
chip_gen: v7x
topology: tpu7x:2x2x1
jax: 0.10.0
libtpu: 0.0.40
codegen_flags: <defaults>
</compile_context>

<pallas_src>
import functools

import jax
import jax.numpy as jnp
from jax.experimental import pallas as pl
from jax.experimental.pallas import tpu as pltpu

_LANE = 128
_SUBLANE = 8


def _stab_embed_kernel(x_ref, mask_ref, pe_ref, w_ref, emb_ref, o_ref):
    # x_ref:    (tb, S, F)   native dtype  feature values
    # mask_ref: (tb, S)      int32         final_mask values
    # pe_ref:   (S, H)       f32           index_embed[:S] + summed bias (grid-constant)
    # w_ref:    (F, H)       f32           fused per-feature projection weights
    # emb_ref:  (4, H)       f32           [final_on, final_off, gamma, beta]
    # o_ref:    (tb, S*H) or (tb, S, H)    output (lane-dense slab when H % 128 != 0)
    x = x_ref[...].astype(jnp.float32)              # cast on the VMEM tile
    tb, S, F = x.shape
    pe = pe_ref[...]                                # (S, H)
    H = pe.shape[1]
    w = w_ref[...]                                  # (F, H)

    # Start from the resident positional table; broadcast over batch on first add.
    h = pe[None, :, :]                              # (1, S, H)

    if F <= 8:
        # Tiny contraction: unrolled VPU broadcast-FMAs (MXU K dim would be >96% padded).
        for i in range(F):
            h = h + x[:, :, i:i + 1] * w[i:i + 1, :][None, :, :]
    else:
        # Tall 2-D MXU dot: fills the MXU M dimension in one issue stream.
        h2 = jnp.dot(x.reshape(tb * S, F), w, preferred_element_type=jnp.float32)
        h = h + h2.reshape(tb, S, H)

    # Mask embeddings: single nested select (mask values are in {0, 1, 2}).
    mask = mask_ref[...].astype(jnp.int32)[:, :, None]           # (tb, S, 1)
    emb = emb_ref[...]
    on, off, gamma, beta = (emb[k:k + 1, :][None, :, :] for k in range(4))
    h = h + jnp.where(mask == 1, on, jnp.where(mask == 2, off, jnp.zeros_like(on)))

    # LayerNorm over the hidden dim (torch default eps=1e-5, biased variance).
    mean = jnp.mean(h, axis=-1, keepdims=True)
    centered = h - mean
    var = jnp.mean(centered * centered, axis=-1, keepdims=True)
    out = centered * jax.lax.rsqrt(var + 1e-5) * gamma + beta

    if o_ref.ndim == 2:   # lane-dense (tb, S*H) slab -> one unmasked store stream
        o_ref[...] = out.reshape(tb, S * H).astype(o_ref.dtype)
    else:
        o_ref[...] = out.astype(o_ref.dtype)


def _round_up(x, m):
    return ((x + m - 1) // m) * m


def _vmem_capacity_bytes():
    """Per-TensorCore VMEM capacity; conservative v7x fallback if unavailable."""
    try:
        cap = getattr(pltpu.get_tpu_info(), "vmem_capacity_bytes", None)
        if cap:
            return int(cap)
    except Exception:
        pass
    return 64 << 20


def _const_vmem_bytes(S, F, H):
    """Lane/sublane-padded VMEM footprint of the grid-constant operands."""
    row = _round_up(H, _LANE) * 4
    return (_round_up(S, _SUBLANE) + _round_up(F, _SUBLANE) + _SUBLANE) * row


def _tile_vmem_bytes(tb, S, F, H, lane_dense_out, x_itemsize, out_itemsize):
    """Double-buffered, lane/sublane-padded footprint of the streamed blocks."""
    x_b = tb * _round_up(S, _SUBLANE) * _round_up(F, _LANE) * x_itemsize
    m_b = _round_up(tb, _SUBLANE) * _round_up(S, _LANE) * 4
    if lane_dense_out:
        o_b = _round_up(tb, _SUBLANE) * _round_up(S * H, _LANE) * out_itemsize
    else:
        o_b = tb * _round_up(S, _SUBLANE) * _round_up(H, _LANE) * out_itemsize
    return 2 * (x_b + m_b + o_b)


def _pick_tile_b(B, S, F, H, lane_dense_out, x_itemsize, out_itemsize, budget_bytes):
    """Largest batch tile that divides B, fits the VMEM budget, keeps the
    second-minor dim of the 2-D blocks sublane-aligned (tb % 8 == 0 or tb == B)
    and, when possible, leaves >= 4 grid steps (2 per TensorCore on v7x)."""
    cands = [tb for tb in range(1, B + 1)
             if B % tb == 0 and (tb == B or tb % _SUBLANE == 0)]

    def fits(tb):
        return _tile_vmem_bytes(tb, S, F, H, lane_dense_out,
                                x_itemsize, out_itemsize) <= budget_bytes

    for min_steps in (4, 2, 1):
        ok = [tb for tb in cands if B // tb >= min_steps and fits(tb)]
        if ok:
            return max(ok)
    return min(cands)      # nothing fits the budget; smallest legal tile


@functools.partial(jax.jit, static_argnames=("tile_b", "out_dtype"))
def stabilizer_embedder_forward(x, final_mask, params, tile_b=None,
                                out_dtype=jnp.float32):
    """x: (B, S, F) float, final_mask: (B, S) int -> (B, S, H) out_dtype."""
    B, S, F = x.shape
    W = params["W"]                                  # (F, H)
    H = W.shape[1]
    assert S <= params["index_embed"].shape[0], "S exceeds num_stabilizers"

    # Lane-dense output slab when H alone would force masked partial stores.
    lane_dense_out = (H % _LANE != 0) and ((S * H) % _LANE == 0)

    # Generation-aware VMEM sizing (v5e/v6e: 128 MiB, v7x: 64 MiB per core).
    vmem_cap = _vmem_capacity_bytes()
    vmem_limit = int(vmem_cap * 3 // 4)              # 96 MiB on v6e, 48 MiB on v7x
    const_raw = _const_vmem_bytes(S, F, H)
    const_single = const_raw > (1 << 20)             # single-buffer big constants
    budget = max(1 << 20,
                 vmem_limit - const_raw * (1 if const_single else 2) - (4 << 20))

    out_itemsize = jnp.dtype(out_dtype).itemsize
    if tile_b is None:
        tile_b = _pick_tile_b(B, S, F, H, lane_dense_out,
                              x.dtype.itemsize, out_itemsize, budget)
    assert B % tile_b == 0

    # Tiny grid-constant operands (no (B, S, H) broadcast materialized, no
    # wrapper-side copy of x).
    pe = (params["index_embed"][:S] + params["b"][None, :]).astype(jnp.float32)
    emb = jnp.stack([params["final_on"], params["final_off"],
                     params["gamma"], params["beta"]], axis=0).astype(jnp.float32)
    mask2 = final_mask.astype(jnp.int32)             # dense 2-D (B, S) block

    def _const_spec(shape):
        idx = lambda i, _n=len(shape): (0,) * _n
        if const_single:
            return pl.BlockSpec(shape, idx, pipeline_mode=pl.Buffered(1))
        return pl.BlockSpec(shape, idx)

    if lane_dense_out:
        out_shape = jax.ShapeDtypeStruct((B, S * H), out_dtype)
        out_spec = pl.BlockSpec((tile_b, S * H), lambda i: (i, 0))
    else:
        out_shape = jax.ShapeDtypeStruct((B, S, H), out_dtype)
        out_spec = pl.BlockSpec((tile_b, S, H), lambda i: (i, 0, 0))

    cost = pl.CostEstimate(
        flops=2 * B * S * F * H + 10 * B * S * H,
        transcendentals=B * S,
        bytes_accessed=(x.size * x.dtype.itemsize + mask2.size * 4
                        + B * S * H * out_itemsize
                        + (pe.size + W.size + emb.size) * 4))

    out = pl.pallas_call(
        _stab_embed_kernel,
        out_shape=out_shape,
        grid_spec=pltpu.PrefetchScalarGridSpec(
            num_scalar_prefetch=0,
            grid=(B // tile_b,),
            in_specs=[
                pl.BlockSpec((tile_b, S, F), lambda i: (i, 0, 0)),   # x tile
                pl.BlockSpec((tile_b, S), lambda i: (i, 0)),         # mask tile
                _const_spec((S, H)),                                 # pos + bias
                _const_spec((F, H)),                                 # W
                _const_spec((4, H)),                                 # on/off/gamma/beta
            ],
            out_specs=out_spec,
        ),
        compiler_params=pltpu.CompilerParams(
            dimension_semantics=("parallel",),
            vmem_limit_bytes=vmem_limit),
        cost_estimate=cost,
    )(x, mask2, pe, W, emb)

    if lane_dense_out:
        out = out.reshape(B, S, H)
    return out


def init_params(key, num_features, hidden_dim, num_stabilizers):
    """Deterministic synthetic parameters matching the torch module's shapes."""
    ks = jax.random.split(key, 4)
    # feature_projs: num_features x Linear(1, hidden_dim); xavier_uniform_ on
    # weight (hidden_dim, 1), bias = 0.  Fused as W: (num_features, hidden_dim).
    limit = jnp.sqrt(6.0 / (1 + hidden_dim))
    W = jax.random.uniform(ks[0], (num_features, hidden_dim),
                           minval=-limit, maxval=limit, dtype=jnp.float32)
    b = jnp.zeros((hidden_dim,), jnp.float32)            # sum of zero biases
    index_embed = 0.02 * jax.random.normal(
        ks[1], (num_stabilizers, hidden_dim), dtype=jnp.float32)
    final_on = jax.random.normal(ks[2], (hidden_dim,), dtype=jnp.float32)
    final_off = jax.random.normal(ks[3], (hidden_dim,), dtype=jnp.float32)
    gamma = jnp.ones((hidden_dim,), jnp.float32)          # LayerNorm weight
    beta = jnp.zeros((hidden_dim,), jnp.float32)          # LayerNorm bias
    return {"W": W, "b": b, "index_embed": index_embed,
            "final_on": final_on, "final_off": final_off,
            "gamma": gamma, "beta": beta}


def reference_forward(x, final_mask, params):
    """Plain-JAX replica of the torch forward, for verification."""
    B, S, F = x.shape
    h = jnp.einsum("bsf,fh->bsh", x, params["W"]) + params["b"]
    h = h + params["index_embed"][:S][None, :, :]
    h = h + (final_mask == 1)[..., None] * params["final_on"]
    h = h + (final_mask == 2)[..., None] * params["final_off"]
    mean = jnp.mean(h, axis=-1, keepdims=True)
    var = jnp.mean((h - mean) ** 2, axis=-1, keepdims=True)
    return (h - mean) / jnp.sqrt(var + 1e-5) * params["gamma"] + params["beta"]


if __name__ == "__main__":
    B, S, F, H = 2, 8, 4, 32          # batch, num_stabilizers(seq), features, hidden
    NUM_STABILIZERS = 8

    key = jax.random.PRNGKey(0)
    kx, km, kp = jax.random.split(key, 3)
    x = jax.random.normal(kx, (B, S, F), dtype=jnp.float32)
    final_mask = jax.random.randint(km, (B, S), 0, 3, dtype=jnp.int32)
    params = init_params(kp, F, H, NUM_STABILIZERS)

    out = stabilizer_embedder_forward(x, final_mask, params)
    out = jax.block_until_ready(out)

    ref = reference_forward(x, final_mask, params)
    assert out.shape == (B, S, H)
    assert jnp.allclose(out, ref, atol=1e-4, rtol=1e-4), "mismatch vs reference"

    print("KERNEL_OK")
</pallas_src>

<mosaic_0001>
module attributes {stable_mosaic.version = 11 : i64} {
  func.func @_stab_embed_kernel(%arg0: i32, %arg1: memref<2x8x4xf32, #tpu.memory_space<vmem>>, %arg2: memref<2x8xi32, #tpu.memory_space<vmem>>, %arg3: memref<8x32xf32, #tpu.memory_space<vmem>>, %arg4: memref<4x32xf32, #tpu.memory_space<vmem>>, %arg5: memref<4x32xf32, #tpu.memory_space<vmem>>, %arg6: memref<2x256xf32, #tpu.memory_space<vmem>>) attributes {dimension_semantics = [#tpu.dimension_semantics<parallel>], iteration_bounds = array<i64: 1>, scalar_prefetch = 0 : i64, scratch_operands = 0 : i64, tpu.core_type = #tpu.core_type<tc>, window_params = [{transform_indices = @transform_0, window_bounds = array<i64: 2, 8, 4>}, {transform_indices = @transform_1, window_bounds = array<i64: 2, 8>}, {pipeline_mode = #tpu.pipeline_mode<synchronous>, transform_indices = @transform_2, window_bounds = array<i64: 8, 32>}, {pipeline_mode = #tpu.pipeline_mode<synchronous>, transform_indices = @transform_3, window_bounds = array<i64: 4, 32>}, {pipeline_mode = #tpu.pipeline_mode<synchronous>, transform_indices = @transform_4, window_bounds = array<i64: 4, 32>}, {transform_indices = @transform_5, window_bounds = array<i64: 2, 256>}]} {
    %c0 = arith.constant 0 : index
    %c0_0 = arith.constant 0 : index
    %c0_1 = arith.constant 0 : index
    %0 = vector.load %arg1[%c0, %c0_0, %c0_1] : memref<2x8x4xf32, #tpu.memory_space<vmem>>, vector<2x8x4xf32>
    %c0_2 = arith.constant 0 : index
    %c0_3 = arith.constant 0 : index
    %1 = vector.load %arg3[%c0_2, %c0_3] : memref<8x32xf32, #tpu.memory_space<vmem>>, vector<8x32xf32>
    %c0_4 = arith.constant 0 : index
    %c0_5 = arith.constant 0 : index
    %2 = vector.load %arg4[%c0_4, %c0_5] : memref<4x32xf32, #tpu.memory_space<vmem>>, vector<4x32xf32>
    %3 = vector.shape_cast %1 : vector<8x32xf32> to vector<1x8x32xf32>
    %4 = vector.extract_strided_slice %0 {offsets = [0, 0, 0], sizes = [2, 8, 1], strides = [1, 1, 1]} : vector<2x8x4xf32> to vector<2x8x1xf32>
    %5 = vector.extract_strided_slice %2 {offsets = [0, 0], sizes = [1, 32], strides = [1, 1]} : vector<4x32xf32> to vector<1x32xf32>
    %6 = vector.shape_cast %5 : vector<1x32xf32> to vector<1x1x32xf32>
    %7 = vector.broadcast %4 : vector<2x8x1xf32> to vector<2x8x32xf32>
    %8 = vector.broadcast %6 : vector<1x1x32xf32> to vector<2x8x32xf32>
    %9 = arith.mulf %7, %8 : vector<2x8x32xf32>
    %10 = vector.broadcast %3 : vector<1x8x32xf32> to vector<2x8x32xf32>
    %11 = arith.addf %10, %9 : vector<2x8x32xf32>
    %12 = vector.extract_strided_slice %0 {offsets = [0, 0, 1], sizes = [2, 8, 1], strides = [1, 1, 1]} : vector<2x8x4xf32> to vector<2x8x1xf32>
    %13 = vector.extract_strided_slice %2 {offsets = [1, 0], sizes = [1, 32], strides = [1, 1]} : vector<4x32xf32> to vector<1x32xf32>
    %14 = vector.shape_cast %13 : vector<1x32xf32> to vector<1x1x32xf32>
    %15 = vector.broadcast %12 : vector<2x8x1xf32> to vector<2x8x32xf32>
    %16 = vector.broadcast %14 : vector<1x1x32xf32> to vector<2x8x32xf32>
    %17 = arith.mulf %15, %16 : vector<2x8x32xf32>
    %18 = arith.addf %11, %17 : vector<2x8x32xf32>
    %19 = vector.extract_strided_slice %0 {offsets = [0, 0, 2], sizes = [2, 8, 1], strides = [1, 1, 1]} : vector<2x8x4xf32> to vector<2x8x1xf32>
    %20 = vector.extract_strided_slice %2 {offsets = [2, 0], sizes = [1, 32], strides = [1, 1]} : vector<4x32xf32> to vector<1x32xf32>
    %21 = vector.shape_cast %20 : vector<1x32xf32> to vector<1x1x32xf32>
    %22 = vector.broadcast %19 : vector<2x8x1xf32> to vector<2x8x32xf32>
    %23 = vector.broadcast %21 : vector<1x1x32xf32> to vector<2x8x32xf32>
    %24 = arith.mulf %22, %23 : vector<2x8x32xf32>
    %25 = arith.addf %18, %24 : vector<2x8x32xf32>
    %26 = vector.extract_strided_slice %0 {offsets = [0, 0, 3], sizes = [2, 8, 1], strides = [1, 1, 1]} : vector<2x8x4xf32> to vector<2x8x1xf32>
    %27 = vector.extract_strided_slice %2 {offsets = [3, 0], sizes = [1, 32], strides = [1, 1]} : vector<4x32xf32> to vector<1x32xf32>
    %28 = vector.shape_cast %27 : vector<1x32xf32> to vector<1x1x32xf32>
    %29 = vector.broadcast %26 : vector<2x8x1xf32> to vector<2x8x32xf32>
    %30 = vector.broadcast %28 : vector<1x1x32xf32> to vector<2x8x32xf32>
    %31 = arith.mulf %29, %30 : vector<2x8x32xf32>
    %32 = arith.addf %25, %31 : vector<2x8x32xf32>
    %c0_6 = arith.constant 0 : index
    %c0_7 = arith.constant 0 : index
    %33 = vector.load %arg2[%c0_6, %c0_7] : memref<2x8xi32, #tpu.memory_space<vmem>>, vector<2x8xi32>
    %34 = vector.shape_cast %33 : vector<2x8xi32> to vector<2x8x1xi32>
    %c0_8 = arith.constant 0 : index
    %c0_9 = arith.constant 0 : index
    %35 = vector.load %arg5[%c0_8, %c0_9] : memref<4x32xf32, #tpu.memory_space<vmem>>, vector<4x32xf32>
    %36 = vector.extract_strided_slice %35 {offsets = [0, 0], sizes = [1, 32], strides = [1, 1]} : vector<4x32xf32> to vector<1x32xf32>
    %37 = vector.shape_cast %36 : vector<1x32xf32> to vector<1x1x32xf32>
    %38 = vector.extract_strided_slice %35 {offsets = [1, 0], sizes = [1, 32], strides = [1, 1]} : vector<4x32xf32> to vector<1x32xf32>
    %39 = vector.shape_cast %38 : vector<1x32xf32> to vector<1x1x32xf32>
    %40 = vector.extract_strided_slice %35 {offsets = [2, 0], sizes = [1, 32], strides = [1, 1]} : vector<4x32xf32> to vector<1x32xf32>
    %41 = vector.shape_cast %40 : vector<1x32xf32> to vector<1x1x32xf32>
    %42 = vector.extract_strided_slice %35 {offsets = [3, 0], sizes = [1, 32], strides = [1, 1]} : vector<4x32xf32> to vector<1x32xf32>
    %43 = vector.shape_cast %42 : vector<1x32xf32> to vector<1x1x32xf32>
    %c1_i32 = arith.constant 1 : i32
    %44 = vector.broadcast %c1_i32 : i32 to vector<2x8x1xi32>
    %45 = arith.cmpi eq, %34, %44 : vector<2x8x1xi32>
    %c2_i32 = arith.constant 2 : i32
    %46 = vector.broadcast %c2_i32 : i32 to vector<2x8x1xi32>
    %47 = arith.cmpi eq, %34, %46 : vector<2x8x1xi32>
    %cst = arith.constant 0.000000e+00 : f32
    %48 = vector.broadcast %cst : f32 to vector<1x1x32xf32>
    %49 = vector.shape_cast %47 : vector<2x8x1xi1> to vector<2x8x1xi1>
    %50 = vector.broadcast %49 : vector<2x8x1xi1> to vector<2x8x32xi1>
    %51 = vector.shape_cast %39 : vector<1x1x32xf32> to vector<1x1x32xf32>
    %52 = vector.broadcast %51 : vector<1x1x32xf32> to vector<2x8x32xf32>
    %53 = vector.shape_cast %48 : vector<1x1x32xf32> to vector<1x1x32xf32>
    %54 = vector.broadcast %53 : vector<1x1x32xf32> to vector<2x8x32xf32>
    %55 = arith.select %50, %52, %54 : vector<2x8x32xi1>, vector<2x8x32xf32>
    %56 = vector.shape_cast %45 : vector<2x8x1xi1> to vector<2x8x1xi1>
    %57 = vector.broadcast %56 : vector<2x8x1xi1> to vector<2x8x32xi1>
    %58 = vector.shape_cast %37 : vector<1x1x32xf32> to vector<1x1x32xf32>
    %59 = vector.broadcast %58 : vector<1x1x32xf32> to vector<2x8x32xf32>
    %60 = arith.select %57, %59, %55 : vector<2x8x32xi1>, vector<2x8x32xf32>
    %61 = arith.addf %32, %60 : vector<2x8x32xf32>
    %cst_10 = arith.constant dense<0.000000e+00> : vector<2x8xf32>
    %62 = vector.multi_reduction <add>, %61, %cst_10 [2] : vector<2x8x32xf32> to vector<2x8xf32>
    %63 = vector.shape_cast %62 : vector<2x8xf32> to vector<2x8x1xf32>
    %cst_11 = arith.constant 3.200000e+01 : f32
    %64 = vector.broadcast %cst_11 : f32 to vector<2x8x1xf32>
    %65 = arith.divf %63, %64 : vector<2x8x1xf32>
    %66 = vector.broadcast %65 : vector<2x8x1xf32> to vector<2x8x32xf32>
    %67 = arith.subf %61, %66 : vector<2x8x32xf32>
    %68 = arith.mulf %67, %67 : vector<2x8x32xf32>
    %cst_12 = arith.constant dense<0.000000e+00> : vector<2x8xf32>
    %69 = vector.multi_reduction <add>, %68, %cst_12 [2] : vector<2x8x32xf32> to vector<2x8xf32>
    %70 = vector.shape_cast %69 : vector<2x8xf32> to vector<2x8x1xf32>
    %cst_13 = arith.constant 3.200000e+01 : f32
    %71 = vector.broadcast %cst_13 : f32 to vector<2x8x1xf32>
    %72 = arith.divf %70, %71 : vector<2x8x1xf32>
    %cst_14 = arith.constant 9.99999974E-6 : f32
    %73 = vector.broadcast %cst_14 : f32 to vector<2x8x1xf32>
    %74 = arith.addf %72, %73 : vector<2x8x1xf32>
    %75 = math.rsqrt %74 : vector<2x8x1xf32>
    %76 = vector.broadcast %75 : vector<2x8x1xf32> to vector<2x8x32xf32>
    %77 = arith.mulf %67, %76 : vector<2x8x32xf32>
    %78 = vector.broadcast %41 : vector<1x1x32xf32> to vector<2x8x32xf32>
    %79 = arith.mulf %77, %78 : vector<2x8x32xf32>
    %80 = vector.broadcast %43 : vector<1x1x32xf32> to vector<2x8x32xf32>
    %81 = arith.addf %79, %80 : vector<2x8x32xf32>
    %82 = vector.shape_cast %81 : vector<2x8x32xf32> to vector<2x256xf32>
    %c0_15 = arith.constant 0 : index
    %c0_16 = arith.constant 0 : index
    %83 = vector.load %arg6[%c0_15, %c0_16] : memref<2x256xf32, #tpu.memory_space<vmem>>, vector<2x256xf32>
    tpu.vector_store %arg6[%c0_15, %c0_16], %82 {strides = array<i32>} : memref<2x256xf32, #tpu.memory_space<vmem>>, vector<2x256xf32>,
    return
  }
  func.func @transform_0(%arg0: i32) -> (i32, i32, i32) {
    %c0_i32 = arith.constant 0 : i32
    %c0_i32_0 = arith.constant 0 : i32
    %c0_i32_1 = arith.constant 0 : i32
    return %arg0, %c0_i32, %c0_i32_0 : i32, i32, i32
  }
  func.func @transform_1(%arg0: i32) -> (i32, i32) {
    %c0_i32 = arith.constant 0 : i32
    %c0_i32_0 = arith.constant 0 : i32
    return %arg0, %c0_i32 : i32, i32
  }
  func.func @transform_2(%arg0: i32) -> (i32, i32) {
    %c0_i32 = arith.constant 0 : i32
    %c0_i32_0 = arith.constant 0 : i32
    %c0_i32_1 = arith.constant 0 : i32
    return %c0_i32, %c0_i32_0 : i32, i32
  }
  func.func @transform_3(%arg0: i32) -> (i32, i32) {
    %c0_i32 = arith.constant 0 : i32
    %c0_i32_0 = arith.constant 0 : i32
    %c0_i32_1 = arith.constant 0 : i32
    return %c0_i32, %c0_i32_0 : i32, i32
  }
  func.func @transform_4(%arg0: i32) -> (i32, i32) {
    %c0_i32 = arith.constant 0 : i32
    %c0_i32_0 = arith.constant 0 : i32
    %c0_i32_1 = arith.constant 0 : i32
    return %c0_i32, %c0_i32_0 : i32, i32
  }
  func.func @transform_5(%arg0: i32) -> (i32, i32) {
    %c0_i32 = arith.constant 0 : i32
    %c0_i32_0 = arith.constant 0 : i32
    return %arg0, %c0_i32 : i32, i32
  }
}

</mosaic_0001>

<llo_original>
// kernel: stabilizer_embedder_forward.1
$region0: #{stabilizer_embedder_forward.1}
  #allocation0 [shape = 'u32[]', space=smem, size = 0x4, offset = 0x4, fixed_abs, tag = 'smem constant byte address 0x4 - core index']
  #allocation1 [shape = 'u32[144,128]{1,0:T(1,128)}', space=vmem, size = 0x12000, scoped, tag = 'internal scratch']
  %s0 = inlined_call_operand.vmem [shape: f32[2,8,4], index: 0, kind: input, shape index: {}]
  %s1 = inlined_call_operand.vmem [shape: s32[2,8], index: 1, kind: input, shape index: {}]
  %s2 = inlined_call_operand.vmem [shape: f32[8,32], index: 2, kind: input, shape index: {}]
  %s3 = inlined_call_operand.vmem [shape: f32[4,32], index: 3, kind: input, shape index: {}]
  %s4 = inlined_call_operand.vmem [shape: f32[4,32], index: 4, kind: input, shape index: {}]
  %s5 = inlined_call_operand.vmem [shape: f32[2,256], index: 5, kind: output, shape index: {}]
  %s6 = sld [smem:[#allocation0]]
  $region30: #{stabilizer_embedder_forward.1} parent=0
    _
  %s8 = ssub.s32 1, %s6
  %s9 = scalar_select 0, %s8, %s6
  // Predicated region
  $region2: #{stabilizer_embedder_forward.1} parent=0 // pred_check
    _
  $region3: #{stabilizer_embedder_forward.1} parent=0 // pred_check_branch
    %11 = sbr.rel (0) target = $region5
  $region4: #{stabilizer_embedder_forward.1} parent=0 // pred_region
    _
  $region5: #{stabilizer_embedder_forward.1} parent=0 // pred_fallthru
    _
  // Predicated region
  $region6: #{stabilizer_embedder_forward.1} parent=0 // pred_check
    _
  $region7: #{stabilizer_embedder_forward.1} parent=0 // pred_check_branch
    %13 = sbr.rel (0) target = $region9
  $region8: #{stabilizer_embedder_forward.1} parent=0 // pred_region
    _
  $region9: #{stabilizer_embedder_forward.1} parent=0 // pred_fallthru
    _
  // Predicated region
  $region10: #{stabilizer_embedder_forward.1} parent=0 // pred_check
    _
  $region11: #{stabilizer_embedder_forward.1} parent=0 // pred_check_branch
    %15 = sbr.rel (0) target = $region13
  $region12: #{stabilizer_embedder_forward.1} parent=0 // pred_region
    _
  $region13: #{stabilizer_embedder_forward.1} parent=0 // pred_fallthru
    _
  // Predicated region
  $region14: #{stabilizer_embedder_forward.1} parent=0 // pred_check
    _
  $region15: #{stabilizer_embedder_forward.1} parent=0 // pred_check_branch
    %17 = sbr.rel (0) target = $region17
  $region16: #{stabilizer_embedder_forward.1} parent=0 // pred_region
    _
  $region17: #{stabilizer_embedder_forward.1} parent=0 // pred_fallthru
    _
  // Predicated region
  $region18: #{stabilizer_embedder_forward.1} parent=0 // pred_check
    _
  $region19: #{stabilizer_embedder_forward.1} parent=0 // pred_check_branch
    %19 = sbr.rel (0) target = $region21
  $region20: #{stabilizer_embedder_forward.1} parent=0 // pred_region
    _
  $region21: #{stabilizer_embedder_forward.1} parent=0 // pred_fallthru
    _
  %v20 = vld [vmem:[%s0] sm:$0xff]
  %v21 = vld [vmem:[%s0 + $0x8] sm:$0xff]
  %v22 = vld [vmem:[%s2] sm:$0xff]
  %v23 = vld [vmem:[%s3] sm:$0xf]
  %25 = vset.pattern.permute.xlu0 0
  %26 = vperm.xlu0 %25, %v20
  %v27 = vpop.permute.xlu0 %26
  %30 = vset.pattern.permute.xlu0 0
  %31 = vperm.xlu0 %30, %v21
  %v32 = vpop.permute.xlu0 %31
  %v34 = vlaneseq
  %v35 = vshrl.u32 %v34, 7
  %v36 = vsub.s32 0, %v35
  %v37 = vrot.slane %v23, %v36
  %v38 = vmul.f32 %v27, %v37
  %v39 = vmul.f32 %v32, %v37
  %v40 = vadd.f32 %v22, %v38
  %v41 = vadd.f32 %v22, %v39
  %42 = vset.pattern.permute.xlu0 1
  %43 = vperm.xlu0 %42, %v20
  %v44 = vpop.permute.xlu0 %43
  %46 = vset.pattern.permute.xlu0 1
  %47 = vperm.xlu0 %46, %v21
  %v48 = vpop.permute.xlu0 %47
  %v50 = vlaneseq
  %v51 = vshrl.u32 %v50, 7
  %v52 = vsub.s32 1, %v51
  %v53 = vrot.slane %v23, %v52
  %v54 = vmul.f32 %v44, %v53
  %v55 = vmul.f32 %v48, %v53
  %v56 = vadd.f32 %v40, %v54
  %v57 = vadd.f32 %v41, %v55
  %58 = vset.pattern.permute.xlu0 2
  %59 = vperm.xlu0 %58, %v20
  %v60 = vpop.permute.xlu0 %59
  %62 = vset.pattern.permute.xlu0 2
  %63 = vperm.xlu0 %62, %v21
  %v64 = vpop.permute.xlu0 %63
  %v66 = vlaneseq
  %v67 = vshrl.u32 %v66, 7
  %v68 = vsub.s32 2, %v67
  %v69 = vrot.slane %v23, %v68
  %v70 = vmul.f32 %v60, %v69
  %v71 = vmul.f32 %v64, %v69
  %v72 = vadd.f32 %v56, %v70
  %v73 = vadd.f32 %v57, %v71
  %74 = vset.pattern.permute.xlu0 3
  %75 = vperm.xlu0 %74, %v20
  %v76 = vpop.permute.xlu0 %75
  %78 = vset.pattern.permute.xlu0 3
  %79 = vperm.xlu0 %78, %v21
  %v80 = vpop.permute.xlu0 %79
  %v82 = vlaneseq
  %v83 = vshrl.u32 %v82, 7
  %v84 = vsub.s32 3, %v83
  %v85 = vrot.slane %v23, %v84
  %v86 = vmul.f32 %v76, %v85
  %v87 = vmul.f32 %v80, %v85
  %v88 = vadd.f32 %v72, %v86
  %v89 = vadd.f32 %v73, %v87
  %v90 = vld [vmem:[%s1] sm:$0x3]
  %v91 = vlaneseq
  %v92 = vshrl.u32 %v91, 7
  %v93 = vsub.s32 0, %v92
  %v94 = vrot.slane %v90, %v93
  %96 = vbcast.lane.b32.xlu0 %v94, 256
  %v97 = vpop.permute.xlu0 %96
  %v98 = vlaneseq
  %v99 = vshrl.u32 %v98, 7
  %v100 = vsub.s32 1, %v99
  %v101 = vrot.slane %v90, %v100
  %103 = vbcast.lane.b32.xlu0 %v101, 256
  %v104 = vpop.permute.xlu0 %103
  %v105 = vld [vmem:[%s4] sm:$0xf]
  %vm106 = vcmp.eq.s32.totalorder %v97, 1
  %vm107 = vcmp.eq.s32.totalorder %v104, 1
  %vm108 = vcmp.eq.s32.totalorder %v97, 2
  %vm109 = vcmp.eq.s32.totalorder %v104, 2
  %v110 = vsel %vm108, 1, 0
  %v111 = vsel %vm109, 1, 0
  %vm112 = vcmp.eq.s32.totalorder %v110, 1
  %vm113 = vcmp.eq.s32.totalorder %v111, 1
  %v114 = vlaneseq
  %v115 = vshrl.u32 %v114, 7
  %v116 = vsub.s32 1, %v115
  %v117 = vrot.slane %v105, %v116
  %v118 = vsel %vm112, %v117, 0.0
  %v119 = vsel %vm113, %v117, 0.0
  %v120 = vsel %vm106, 1, 0
  %v121 = vsel %vm107, 1, 0
  %vm122 = vcmp.eq.s32.totalorder %v120, 1
  %vm123 = vcmp.eq.s32.totalorder %v121, 1
  %v124 = vlaneseq
  %v125 = vshrl.u32 %v124, 7
  %v126 = vsub.s32 0, %v125
  %v127 = vrot.slane %v105, %v126
  %v128 = vsel %vm122, %v127, %v118
  %v129 = vsel %vm123, %v127, %v119
  %v130 = vadd.f32 %v88, %v128
  %v131 = vadd.f32 %v89, %v129
  %vm132 = vcmask 261120
  %v133 = vsel %vm132, %v130, 0.0
  %134 = vadd.xlane.f32.xlu0 %v133
  %v135 = vpop.xlane.xlu0 %134
  %v136 = vsel %vm132, %v131, 0.0
  %137 = vadd.xlane.f32.xlu0 %v136
  %v138 = vpop.xlane.xlu0 %137
  %v139 = vrcp.pop 32.0
  %v140 = vmul.f32 %v135, %v139
  %v141 = vmul.f32 %v138, %v139
  %v142 = vsub.f32 %v130, %v140
  %v143 = vsub.f32 %v131, %v141
  %v144 = vmul.f32 %v142, %v142
  %v145 = vmul.f32 %v143, %v143
  %v146 = vsel %vm132, %v144, 0.0
  %147 = vadd.xlane.f32.xlu0 %v146
  %v148 = vpop.xlane.xlu0 %147
  %v149 = vsel %vm132, %v145, 0.0
  %150 = vadd.xlane.f32.xlu0 %v149
  %v151 = vpop.xlane.xlu0 %150
  %v152 = vmul.f32 %v148, %v139
  %v153 = vmul.f32 %v151, %v139
  %v154 = vadd.f32 %v152, 1e-05
  %v155 = vadd.f32 %v153, 1e-05
  %v156 = vrsqrt.pop %v154
  %v157 = vrsqrt.pop %v155
  %v158 = vmul.f32 %v142, %v156
  %v159 = vmul.f32 %v143, %v157
  %v160 = vlaneseq
  %v161 = vshrl.u32 %v160, 7
  %v162 = vsub.s32 2, %v161
  %v163 = vrot.slane %v105, %v162
  %v164 = vmul.f32 %v158, %v163
  %v165 = vmul.f32 %v159, %v163
  %v166 = vlaneseq
  %v167 = vshrl.u32 %v166, 7
  %v168 = vsub.s32 3, %v167
  %v169 = vrot.slane %v105, %v168
  %v170 = vadd.f32 %v164, %v169
  %v171 = vadd.f32 %v165, %v169
  %v172 = vcombine.high %v170, 0.0
  %v174 = vunpack.c.l.s4 1983009808
  %v175 = vunpack.c.0.s8 %v174
  %v176 = vlaneseq
  %v177 = vshrl.u32 %v176, 7
  %v178 = vsub.s32 %v175, %v177
  %v179 = vrot.slane %v170, %v178
  %v181 = vunpack.c.l.s4 1983009808
  %v182 = vunpack.c.0.s8 %v181
  %v183 = vlaneseq
  %v184 = vshrl.u32 %v183, 7
  %v185 = vsub.s32 %v182, %v184
  %v186 = vrot.slane %v172, %v185
  %v187 = vcombine.high %v171, 0.0
  %v189 = vunpack.c.l.s4 1983009808
  %v190 = vunpack.c.0.s8 %v189
  %v191 = vlaneseq
  %v192 = vshrl.u32 %v191, 7
  %v193 = vsub.s32 %v190, %v192
  %v194 = vrot.slane %v171, %v193
  %v196 = vunpack.c.l.s4 1983009808
  %v197 = vunpack.c.0.s8 %v196
  %v198 = vlaneseq
  %v199 = vshrl.u32 %v198, 7
  %v200 = vsub.s32 %v197, %v199
  %v201 = vrot.slane %v187, %v200
  %v202 = vcombine.low %v179, %v194
  %v203 = vcombine.high %v179, %v194
  %v205 = vunpack.c.l.s4 1934713408
  %v206 = vunpack.c.0.s8 %v205
  %v207 = vlaneseq
  %v208 = vshrl.u32 %v207, 7
  %v209 = vsub.s32 %v206, %v208
  %v210 = vrot.slane %v202, %v209
  %v212 = vunpack.c.l.s4 1934713408
  %v213 = vunpack.c.0.s8 %v212
  %v214 = vlaneseq
  %v215 = vshrl.u32 %v214, 7
  %v216 = vsub.s32 %v213, %v215
  %v217 = vrot.slane %v203, %v216
  %v218 = vcombine.low %v186, %v201
  %v219 = vcombine.high %v186, %v201
  %v221 = vunpack.c.l.s4 1934713408
  %v222 = vunpack.c.0.s8 %v221
  %v223 = vlaneseq
  %v224 = vshrl.u32 %v223, 7
  %v225 = vsub.s32 %v222, %v224
  %v226 = vrot.slane %v218, %v225
  %v228 = vunpack.c.l.s4 1934713408
  %v229 = vunpack.c.0.s8 %v228
  %v230 = vlaneseq
  %v231 = vshrl.u32 %v230, 7
  %v232 = vsub.s32 %v229, %v231
  %v233 = vrot.slane %v219, %v232
  %v234 = vcombine.high %v210, 0.0
  %v235 = vcombine.high %v217, 0.0
  %v236 = vcombine.high %v226, 0.0
  %v237 = vcombine.high %v233, 0.0
  %239 = vrot.lane.b32.xlu0 %v234, 32
  %v240 = vpop.permute.xlu0 %239
  %243 = vrot.lane.b32.xlu0 %v217, 64
  %v244 = vpop.permute.xlu0 %243
  %247 = vrot.lane.b32.xlu0 %v235, 96
  %v248 = vpop.permute.xlu0 %247
  %251 = vrot.lane.b32.xlu0 %v236, 32
  %v252 = vpop.permute.xlu0 %251
  %255 = vrot.lane.b32.xlu0 %v233, 64
  %v256 = vpop.permute.xlu0 %255
  %259 = vrot.lane.b32.xlu0 %v237, 96
  %v260 = vpop.permute.xlu0 %259
  %v262 = vsel %vm132, %v210, %v240
  %vm263 = vcmask 523264
  %v264 = vsel %vm263, %v262, %v244
  %vm265 = vcmask 785408
  %v266 = vsel %vm265, %v264, %v248
  %v267 = vsel %vm132, %v226, %v252
  %v268 = vsel %vm263, %v267, %v256
  %v269 = vsel %vm265, %v268, %v260
  %v272 = vcombine.low %v266, %v269
  %v274 = vunpack.c.l.s4 1983009808
  %v275 = vunpack.c.0.s8 %v274
  %v276 = vlaneseq
  %v277 = vshrl.u32 %v276, 7
  %v278 = vsub.s32 %v275, %v277
  %v279 = vrot.slane %v272, %v278
  %281 = vst [vmem:[%s5] sm:$0xf] %v279
  // Predicated region
  $region22: #{stabilizer_embedder_forward.1} parent=0 // pred_check
    _
  $region23: #{stabilizer_embedder_forward.1} parent=0 // pred_check_branch
    %283 = sbr.rel (0) target = $region25
  $region24: #{stabilizer_embedder_forward.1} parent=0 // pred_region
    _
  $region25: #{stabilizer_embedder_forward.1} parent=0 // pred_fallthru
    _
  // Predicated region
  $region26: #{stabilizer_embedder_forward.1} parent=0 // pred_check
    _
  $region27: #{stabilizer_embedder_forward.1} parent=0 // pred_check_branch
    %285 = sbr.rel (0) target = $region29
  $region28: #{stabilizer_embedder_forward.1} parent=0 // pred_region
    _
  $region29: #{stabilizer_embedder_forward.1} parent=0 // pred_fallthru
    _

</llo_original>
